<compile_context>
chip_gen: v6e
topology: v6e:2x2x1
jax: 0.10.0
libtpu: 0.0.40
codegen_flags: <defaults>
</compile_context>

<pallas_src>
import functools
import math

import jax
import jax.numpy as jnp
from jax.experimental import pallas as pl
from jax.experimental.pallas import tpu as pltpu


def _erf_f32(x):
    # Abramowitz & Stegun 7.1.26 polynomial erf, max abs error ~1.5e-7
    # (float32 level).  Built only from abs/exp/where so it is guaranteed to
    # lower in Mosaic; matches torch.nn.functional.gelu's exact (erf) form.
    p = 0.3275911
    a1, a2, a3, a4, a5 = (0.254829592, -0.284496736, 1.421413741,
                          -1.453152027, 1.061405429)
    ax = jnp.abs(x)
    t = 1.0 / (1.0 + p * ax)
    poly = ((((a5 * t + a4) * t + a3) * t + a2) * t + a1) * t
    y = 1.0 - poly * jnp.exp(-(ax * ax))
    return jnp.where(x >= 0, y, -y)


def _eablock_kernel(x_ref, w1_ref, b1_ref, w0_ref, w0t_ref, w2_ref,
                    gavg_ref, gamma_ref, beta_ref, o_ref, *, gn_eps):
    # x_ref block: (1, C, N) for the current batch element; N = H*W on lanes.
    x = x_ref[0].astype(jnp.float32)                 # (C, N)  residual source
    w1 = w1_ref[...].astype(jnp.float32)             # (C, C)  conv1 weight
    b1 = b1_ref[...].astype(jnp.float32)             # (C, 1)  conv1 bias
    w0 = w0_ref[...].astype(jnp.float32)             # (K, C)  linear_0 weight
    w0t = w0t_ref[...].astype(jnp.float32)           # (C, K)  tied linear_1 weight (= w0.T)
    w2 = w2_ref[...].astype(jnp.float32)             # (C, C)  conv2 weight
    gavg = gavg_ref[...].astype(jnp.float32)         # (C, C)  1/cg within a GN group, else 0
    gamma = gamma_ref[...].astype(jnp.float32)       # (C, 1)
    beta = beta_ref[...].astype(jnp.float32)         # (C, 1)

    # conv1 (1x1): W1 @ x + b1
    h = jnp.dot(w1, x, preferred_element_type=jnp.float32) + b1           # (C, N)
    # linear_0 (Conv1d, kernel 1, no bias)
    attn = jnp.dot(w0, h, preferred_element_type=jnp.float32)             # (K, N)
    # softmax over the spatial (lane) axis
    attn = attn - jnp.max(attn, axis=-1, keepdims=True)
    e = jnp.exp(attn)
    attn = e / jnp.sum(e, axis=-1, keepdims=True)
    # renormalise over the k (sublane) axis:  attn / (1e-9 + sum_k attn)
    attn = attn / (1e-9 + jnp.sum(attn, axis=0, keepdims=True))
    # linear_1 (weights tied to linear_0): W0^T @ attn
    y = jnp.dot(w0t, attn, preferred_element_type=jnp.float32)            # (C, N)
    # conv2 (1x1, no bias)
    y = jnp.dot(w2, y, preferred_element_type=jnp.float32)                # (C, N)

    # GroupNorm(4, C): biased variance over (channels-in-group x N), two-pass
    # centered stats.  gavg @ z averages channels within each group and
    # broadcasts back per channel -> no reshapes/transposes needed.
    gmean_pos = jnp.dot(gavg, y, preferred_element_type=jnp.float32)      # (C, N)
    mu = jnp.mean(gmean_pos, axis=-1, keepdims=True)                      # (C, 1) group mean
    yc = y - mu
    gvar_pos = jnp.dot(gavg, yc * yc, preferred_element_type=jnp.float32)
    var = jnp.mean(gvar_pos, axis=-1, keepdims=True)                      # (C, 1) biased group var
    y = yc * jax.lax.rsqrt(var + gn_eps) * gamma + beta

    # residual add + exact GELU (erf form)
    y = y + x
    y = 0.5 * y * (1.0 + _erf_f32(y * 0.7071067811865475))
    o_ref[0] = y.astype(o_ref.dtype)


def eablock_forward(x, params, *, gn_groups=4, gn_eps=1e-5):
    b, c, hh, ww = x.shape
    n = hh * ww
    k = params["w0"].shape[0]
    assert c % gn_groups == 0, "GroupNorm(4, C) requires C % 4 == 0"
    cg = c // gn_groups

    x3 = x.reshape(b, c, n)                                   # free reshape (no transpose)
    gidx = jnp.arange(c) // cg
    gavg = (gidx[:, None] == gidx[None, :]).astype(jnp.float32) / float(cg)

    w1 = params["w1"]
    b1 = params["b1"].reshape(c, 1)
    w0 = params["w0"]
    w0t = jnp.transpose(w0)                                   # tiny, done once outside kernel
    w2 = params["w2"]
    gamma = params["gamma"].reshape(c, 1)
    beta = params["beta"].reshape(c, 1)

    kernel = functools.partial(_eablock_kernel, gn_eps=gn_eps)
    full2d = lambda i: (0, 0)

    out3 = pl.pallas_call(
        kernel,
        out_shape=jax.ShapeDtypeStruct((b, c, n), x.dtype),
        grid_spec=pltpu.PrefetchScalarGridSpec(
            num_scalar_prefetch=0,
            grid=(b,),
            in_specs=[
                pl.BlockSpec((1, c, n), lambda i: (i, 0, 0)),  # x slab for batch i
                pl.BlockSpec((c, c), full2d),                  # conv1 weight
                pl.BlockSpec((c, 1), full2d),                  # conv1 bias
                pl.BlockSpec((k, c), full2d),                  # linear_0 weight
                pl.BlockSpec((c, k), full2d),                  # tied linear_1 weight
                pl.BlockSpec((c, c), full2d),                  # conv2 weight
                pl.BlockSpec((c, c), full2d),                  # group-average matrix
                pl.BlockSpec((c, 1), full2d),                  # GN gamma
                pl.BlockSpec((c, 1), full2d),                  # GN beta
            ],
            out_specs=pl.BlockSpec((1, c, n), lambda i: (i, 0, 0)),
        ),
        compiler_params=pltpu.CompilerParams(
            dimension_semantics=("parallel",),                 # batch steps across TCs (v7x)
            vmem_limit_bytes=32 * 1024 * 1024,                 # explicit; safe on v5e/v6e/v7x
        ),
    )(x3, w1, b1, w0, w0t, w2, gavg, gamma, beta)
    return out3.reshape(b, c, hh, ww)


class EAblock:
    """JAX/Pallas port of the PyTorch EAblock (all 1x1 convs, fused into one kernel)."""

    def __init__(self, in_c, key):
        self.in_c = in_c
        self.k = in_c * 4

        def kaiming_uniform(kk, shape, fan_in):
            bound = 1.0 / math.sqrt(fan_in)
            return jax.random.uniform(kk, shape, jnp.float32, -bound, bound)

        k1, k2, k3, k4 = jax.random.split(key, 4)
        self.params = {
            "w1": kaiming_uniform(k1, (in_c, in_c), in_c),     # conv1 1x1 weight
            "b1": kaiming_uniform(k2, (in_c,), in_c),          # conv1 bias
            "w0": kaiming_uniform(k3, (self.k, in_c), in_c),   # linear_0 weight
            # linear_1 weight is tied (= linear_0 weight permuted) -> handled as w0.T
            "w2": kaiming_uniform(k4, (in_c, in_c), in_c),     # conv2 1x1 weight (no bias)
            "gamma": jnp.ones((in_c,), jnp.float32),           # GroupNorm affine (PyTorch init)
            "beta": jnp.zeros((in_c,), jnp.float32),
        }
        self.gn_groups = 4
        self.gn_eps = 1e-5

    def __call__(self, x):
        return eablock_forward(x, self.params,
                               gn_groups=self.gn_groups, gn_eps=self.gn_eps)


def _ref_eablock(x, params, gn_groups=4, gn_eps=1e-5):
    """Plain-JAX reference mirroring the PyTorch EAblock.forward."""
    hp = jax.lax.Precision.HIGHEST
    b, c, hh, ww = x.shape
    n = hh * ww
    w1, b1, w0, w2 = params["w1"], params["b1"], params["w0"], params["w2"]
    gamma, beta = params["gamma"], params["beta"]

    idn = x.reshape(b, c, n).astype(jnp.float32)
    h = jnp.einsum("oc,bcn->bon", w1, idn, precision=hp) + b1[None, :, None]
    attn = jnp.einsum("kc,bcn->bkn", w0, h, precision=hp)
    attn = jax.nn.softmax(attn, axis=-1)
    attn = attn / (1e-9 + attn.sum(axis=1, keepdims=True))
    y = jnp.einsum("kc,bkn->bcn", w0, attn, precision=hp)      # tied linear_1
    y = jnp.einsum("oc,bcn->bon", w2, y, precision=hp)
    cg = c // gn_groups
    yg = y.reshape(b, gn_groups, cg * n)
    mu = yg.mean(axis=-1, keepdims=True)
    var = ((yg - mu) ** 2).mean(axis=-1, keepdims=True)
    y = ((yg - mu) / jnp.sqrt(var + gn_eps)).reshape(b, c, n)
    y = y * gamma[None, :, None] + beta[None, :, None]
    y = y + idn
    y = 0.5 * y * (1.0 + jax.scipy.special.erf(y * 0.7071067811865475))
    return y.reshape(b, c, hh, ww)


if __name__ == "__main__":
    key = jax.random.PRNGKey(0)
    k_x, k_p = jax.random.split(key)

    in_c = 4
    block = EAblock(in_c, k_p)
    x = jax.random.normal(k_x, (2, in_c, 16, 16), dtype=jnp.float32)

    y = jax.block_until_ready(block(x))
    ref = _ref_eablock(x, block.params, block.gn_groups, block.gn_eps)

    assert y.shape == x.shape
    err = float(jnp.max(jnp.abs(y - ref)))
    assert jnp.allclose(y, ref, atol=1e-4, rtol=1e-4), f"max abs err = {err}"

    print("KERNEL_OK")
</pallas_src>

<mosaic_0001>
module attributes {stable_mosaic.version = 11 : i64} {
  func.func @_eablock_kernel(%arg0: i32, %arg1: memref<1x4x256xf32, #tpu.memory_space<vmem>>, %arg2: memref<4x4xf32, #tpu.memory_space<vmem>>, %arg3: memref<4x1xf32, #tpu.memory_space<vmem>>, %arg4: memref<16x4xf32, #tpu.memory_space<vmem>>, %arg5: memref<4x16xf32, #tpu.memory_space<vmem>>, %arg6: memref<4x4xf32, #tpu.memory_space<vmem>>, %arg7: memref<4x4xf32, #tpu.memory_space<vmem>>, %arg8: memref<4x1xf32, #tpu.memory_space<vmem>>, %arg9: memref<4x1xf32, #tpu.memory_space<vmem>>, %arg10: memref<1x4x256xf32, #tpu.memory_space<vmem>>) attributes {dimension_semantics = [#tpu.dimension_semantics<parallel>], iteration_bounds = array<i64: 2>, scalar_prefetch = 0 : i64, scratch_operands = 0 : i64, tpu.core_type = #tpu.core_type<tc>, window_params = [{transform_indices = @transform_0, window_bounds = array<i64: 1, 4, 256>}, {pipeline_mode = #tpu.pipeline_mode<synchronous>, transform_indices = @transform_1, window_bounds = array<i64: 4, 4>}, {pipeline_mode = #tpu.pipeline_mode<synchronous>, transform_indices = @transform_2, window_bounds = array<i64: 4, 1>}, {pipeline_mode = #tpu.pipeline_mode<synchronous>, transform_indices = @transform_3, window_bounds = array<i64: 16, 4>}, {pipeline_mode = #tpu.pipeline_mode<synchronous>, transform_indices = @transform_4, window_bounds = array<i64: 4, 16>}, {pipeline_mode = #tpu.pipeline_mode<synchronous>, transform_indices = @transform_5, window_bounds = array<i64: 4, 4>}, {pipeline_mode = #tpu.pipeline_mode<synchronous>, transform_indices = @transform_6, window_bounds = array<i64: 4, 4>}, {pipeline_mode = #tpu.pipeline_mode<synchronous>, transform_indices = @transform_7, window_bounds = array<i64: 4, 1>}, {pipeline_mode = #tpu.pipeline_mode<synchronous>, transform_indices = @transform_8, window_bounds = array<i64: 4, 1>}, {transform_indices = @transform_9, window_bounds = array<i64: 1, 4, 256>}]} {
    %c0 = arith.constant 0 : index
    %c0_0 = arith.constant 0 : index
    %c0_1 = arith.constant 0 : index
    %0 = vector.load %arg1[%c0, %c0_0, %c0_1] : memref<1x4x256xf32, #tpu.memory_space<vmem>>, vector<1x4x256xf32>
    %1 = vector.shape_cast %0 : vector<1x4x256xf32> to vector<4x256xf32>
    %c0_2 = arith.constant 0 : index
    %c0_3 = arith.constant 0 : index
    %2 = vector.load %arg2[%c0_2, %c0_3] : memref<4x4xf32, #tpu.memory_space<vmem>>, vector<4x4xf32>
    %c0_4 = arith.constant 0 : index
    %c0_5 = arith.constant 0 : index
    %3 = vector.load %arg3[%c0_4, %c0_5] : memref<4x1xf32, #tpu.memory_space<vmem>>, vector<4x1xf32>
    %c0_6 = arith.constant 0 : index
    %c0_7 = arith.constant 0 : index
    %4 = vector.load %arg4[%c0_6, %c0_7] : memref<16x4xf32, #tpu.memory_space<vmem>>, vector<16x4xf32>
    %c0_8 = arith.constant 0 : index
    %c0_9 = arith.constant 0 : index
    %5 = vector.load %arg5[%c0_8, %c0_9] : memref<4x16xf32, #tpu.memory_space<vmem>>, vector<4x16xf32>
    %c0_10 = arith.constant 0 : index
    %c0_11 = arith.constant 0 : index
    %6 = vector.load %arg6[%c0_10, %c0_11] : memref<4x4xf32, #tpu.memory_space<vmem>>, vector<4x4xf32>
    %c0_12 = arith.constant 0 : index
    %c0_13 = arith.constant 0 : index
    %7 = vector.load %arg7[%c0_12, %c0_13] : memref<4x4xf32, #tpu.memory_space<vmem>>, vector<4x4xf32>
    %c0_14 = arith.constant 0 : index
    %c0_15 = arith.constant 0 : index
    %8 = vector.load %arg8[%c0_14, %c0_15] : memref<4x1xf32, #tpu.memory_space<vmem>>, vector<4x1xf32>
    %c0_16 = arith.constant 0 : index
    %c0_17 = arith.constant 0 : index
    %9 = vector.load %arg9[%c0_16, %c0_17] : memref<4x1xf32, #tpu.memory_space<vmem>>, vector<4x1xf32>
    %cst = arith.constant dense<0.000000e+00> : vector<4x256xf32>
    %10 = tpu.matmul %2, %1, %cst {dimension_numbers = #tpu.dot_dimension_numbers<[1], [0], [0], [1], [0, 0, 1, 1], [], []>} : vector<4x4xf32>, vector<4x256xf32>, vector<4x256xf32> -> vector<4x256xf32>
    %11 = vector.broadcast %3 : vector<4x1xf32> to vector<4x256xf32>
    %12 = arith.addf %10, %11 : vector<4x256xf32>
    %cst_18 = arith.constant dense<0.000000e+00> : vector<16x256xf32>
    %13 = tpu.matmul %4, %12, %cst_18 {dimension_numbers = #tpu.dot_dimension_numbers<[1], [0], [0], [1], [0, 0, 1, 1], [], []>} : vector<16x4xf32>, vector<4x256xf32>, vector<16x256xf32> -> vector<16x256xf32>
    %cst_19 = arith.constant dense<0xFF800000> : vector<16xf32>
    %14 = vector.multi_reduction <maximumf>, %13, %cst_19 [1] : vector<16x256xf32> to vector<16xf32>
    %15 = vector.shape_cast %14 : vector<16xf32> to vector<16x1xf32>
    %16 = vector.broadcast %15 : vector<16x1xf32> to vector<16x256xf32>
    %17 = arith.subf %13, %16 : vector<16x256xf32>
    %18 = math.exp %17 : vector<16x256xf32>
    %cst_20 = arith.constant dense<0.000000e+00> : vector<16xf32>
    %19 = vector.multi_reduction <add>, %18, %cst_20 [1] : vector<16x256xf32> to vector<16xf32>
    %20 = vector.shape_cast %19 : vector<16xf32> to vector<16x1xf32>
    %21 = vector.broadcast %20 : vector<16x1xf32> to vector<16x256xf32>
    %22 = arith.divf %18, %21 : vector<16x256xf32>
    %cst_21 = arith.constant dense<0.000000e+00> : vector<256xf32>
    %23 = vector.multi_reduction <add>, %22, %cst_21 [0] : vector<16x256xf32> to vector<256xf32>
    %24 = vector.shape_cast %23 : vector<256xf32> to vector<1x256xf32>
    %cst_22 = arith.constant 9.99999971E-10 : f32
    %25 = vector.broadcast %cst_22 : f32 to vector<1x256xf32>
    %26 = arith.addf %25, %24 : vector<1x256xf32>
    %27 = vector.broadcast %26 : vector<1x256xf32> to vector<16x256xf32>
    %28 = arith.divf %22, %27 : vector<16x256xf32>
    %cst_23 = arith.constant dense<0.000000e+00> : vector<4x256xf32>
    %29 = tpu.matmul %5, %28, %cst_23 {dimension_numbers = #tpu.dot_dimension_numbers<[1], [0], [0], [1], [0, 0, 1, 1], [], []>} : vector<4x16xf32>, vector<16x256xf32>, vector<4x256xf32> -> vector<4x256xf32>
    %cst_24 = arith.constant dense<0.000000e+00> : vector<4x256xf32>
    %30 = tpu.matmul %6, %29, %cst_24 {dimension_numbers = #tpu.dot_dimension_numbers<[1], [0], [0], [1], [0, 0, 1, 1], [], []>} : vector<4x4xf32>, vector<4x256xf32>, vector<4x256xf32> -> vector<4x256xf32>
    %cst_25 = arith.constant dense<0.000000e+00> : vector<4x256xf32>
    %31 = tpu.matmul %7, %30, %cst_25 {dimension_numbers = #tpu.dot_dimension_numbers<[1], [0], [0], [1], [0, 0, 1, 1], [], []>} : vector<4x4xf32>, vector<4x256xf32>, vector<4x256xf32> -> vector<4x256xf32>
    %cst_26 = arith.constant dense<0.000000e+00> : vector<4xf32>
    %32 = vector.multi_reduction <add>, %31, %cst_26 [1] : vector<4x256xf32> to vector<4xf32>
    %33 = vector.shape_cast %32 : vector<4xf32> to vector<4x1xf32>
    %cst_27 = arith.constant 2.560000e+02 : f32
    %34 = vector.broadcast %cst_27 : f32 to vector<4x1xf32>
    %35 = arith.divf %33, %34 : vector<4x1xf32>
    %36 = vector.broadcast %35 : vector<4x1xf32> to vector<4x256xf32>
    %37 = arith.subf %30, %36 : vector<4x256xf32>
    %38 = arith.mulf %37, %37 : vector<4x256xf32>
    %cst_28 = arith.constant dense<0.000000e+00> : vector<4x256xf32>
    %39 = tpu.matmul %7, %38, %cst_28 {dimension_numbers = #tpu.dot_dimension_numbers<[1], [0], [0], [1], [0, 0, 1, 1], [], []>} : vector<4x4xf32>, vector<4x256xf32>, vector<4x256xf32> -> vector<4x256xf32>
    %cst_29 = arith.constant dense<0.000000e+00> : vector<4xf32>
    %40 = vector.multi_reduction <add>, %39, %cst_29 [1] : vector<4x256xf32> to vector<4xf32>
    %41 = vector.shape_cast %40 : vector<4xf32> to vector<4x1xf32>
    %cst_30 = arith.constant 2.560000e+02 : f32
    %42 = vector.broadcast %cst_30 : f32 to vector<4x1xf32>
    %43 = arith.divf %41, %42 : vector<4x1xf32>
    %cst_31 = arith.constant 9.99999974E-6 : f32
    %44 = vector.broadcast %cst_31 : f32 to vector<4x1xf32>
    %45 = arith.addf %43, %44 : vector<4x1xf32>
    %46 = math.rsqrt %45 : vector<4x1xf32>
    %47 = vector.broadcast %46 : vector<4x1xf32> to vector<4x256xf32>
    %48 = arith.mulf %37, %47 : vector<4x256xf32>
    %49 = vector.broadcast %8 : vector<4x1xf32> to vector<4x256xf32>
    %50 = arith.mulf %48, %49 : vector<4x256xf32>
    %51 = vector.broadcast %9 : vector<4x1xf32> to vector<4x256xf32>
    %52 = arith.addf %50, %51 : vector<4x256xf32>
    %53 = arith.addf %52, %1 : vector<4x256xf32>
    %cst_32 = arith.constant 5.000000e-01 : f32
    %54 = vector.broadcast %cst_32 : f32 to vector<4x256xf32>
    %55 = arith.mulf %54, %53 : vector<4x256xf32>
    %cst_33 = arith.constant 0.707106769 : f32
    %56 = vector.broadcast %cst_33 : f32 to vector<4x256xf32>
    %57 = arith.mulf %53, %56 : vector<4x256xf32>
    %58 = math.absf %57 : vector<4x256xf32>
    %cst_34 = arith.constant 0.327591091 : f32
    %59 = vector.broadcast %cst_34 : f32 to vector<4x256xf32>
    %60 = arith.mulf %59, %58 : vector<4x256xf32>
    %cst_35 = arith.constant 1.000000e+00 : f32
    %61 = vector.broadcast %cst_35 : f32 to vector<4x256xf32>
    %62 = arith.addf %61, %60 : vector<4x256xf32>
    %cst_36 = arith.constant 1.000000e+00 : f32
    %63 = vector.broadcast %cst_36 : f32 to vector<4x256xf32>
    %64 = arith.divf %63, %62 : vector<4x256xf32>
    %cst_37 = arith.constant 1.06140542 : f32
    %65 = vector.broadcast %cst_37 : f32 to vector<4x256xf32>
    %66 = arith.mulf %65, %64 : vector<4x256xf32>
    %cst_38 = arith.constant -1.45315206 : f32
    %67 = vector.broadcast %cst_38 : f32 to vector<4x256xf32>
    %68 = arith.addf %66, %67 : vector<4x256xf32>
    %69 = arith.mulf %68, %64 : vector<4x256xf32>
    %cst_39 = arith.constant 1.42141378 : f32
    %70 = vector.broadcast %cst_39 : f32 to vector<4x256xf32>
    %71 = arith.addf %69, %70 : vector<4x256xf32>
    %72 = arith.mulf %71, %64 : vector<4x256xf32>
    %cst_40 = arith.constant -0.284496725 : f32
    %73 = vector.broadcast %cst_40 : f32 to vector<4x256xf32>
    %74 = arith.addf %72, %73 : vector<4x256xf32>
    %75 = arith.mulf %74, %64 : vector<4x256xf32>
    %cst_41 = arith.constant 0.254829586 : f32
    %76 = vector.broadcast %cst_41 : f32 to vector<4x256xf32>
    %77 = arith.addf %75, %76 : vector<4x256xf32>
    %78 = arith.mulf %77, %64 : vector<4x256xf32>
    %79 = arith.mulf %58, %58 : vector<4x256xf32>
    %cst_42 = arith.constant 0.000000e+00 : f32
    %80 = vector.broadcast %cst_42 : f32 to vector<4x256xf32>
    %81 = arith.subf %80, %79 : vector<4x256xf32>
    %82 = math.exp %81 : vector<4x256xf32>
    %83 = arith.mulf %78, %82 : vector<4x256xf32>
    %cst_43 = arith.constant 1.000000e+00 : f32
    %84 = vector.broadcast %cst_43 : f32 to vector<4x256xf32>
    %85 = arith.subf %84, %83 : vector<4x256xf32>
    %cst_44 = arith.constant 0.000000e+00 : f32
    %86 = vector.broadcast %cst_44 : f32 to vector<4x256xf32>
    %87 = arith.cmpf oge, %57, %86 : vector<4x256xf32>
    %cst_45 = arith.constant 0.000000e+00 : f32
    %88 = vector.broadcast %cst_45 : f32 to vector<4x256xf32>
    %89 = arith.subf %88, %85 : vector<4x256xf32>
    %90 = arith.select %87, %85, %89 : vector<4x256xi1>, vector<4x256xf32>
    %cst_46 = arith.constant 1.000000e+00 : f32
    %91 = vector.broadcast %cst_46 : f32 to vector<4x256xf32>
    %92 = arith.addf %91, %90 : vector<4x256xf32>
    %93 = arith.mulf %55, %92 : vector<4x256xf32>
    %c0_47 = arith.constant 0 : index
    %c0_48 = arith.constant 0 : index
    %c0_49 = arith.constant 0 : index
    %94 = vector.load %arg10[%c0_47, %c0_48, %c0_49] : memref<1x4x256xf32, #tpu.memory_space<vmem>>, vector<1x4x256xf32>
    %95 = vector.shape_cast %94 : vector<1x4x256xf32> to vector<4x256xf32>
    %96 = vector.shape_cast %93 : vector<4x256xf32> to vector<1x4x256xf32>
    tpu.vector_store %arg10[%c0_47, %c0_48, %c0_49], %96 {strides = array<i32>} : memref<1x4x256xf32, #tpu.memory_space<vmem>>, vector<1x4x256xf32>,
    return
  }
  func.func @transform_0(%arg0: i32) -> (i32, i32, i32) {
    %c0_i32 = arith.constant 0 : i32
    %c0_i32_0 = arith.constant 0 : i32
    %c0_i32_1 = arith.constant 0 : i32
    return %arg0, %c0_i32, %c0_i32_0 : i32, i32, i32
  }
  func.func @transform_1(%arg0: i32) -> (i32, i32) {
    %c0_i32 = arith.constant 0 : i32
    %c0_i32_0 = arith.constant 0 : i32
    %c0_i32_1 = arith.constant 0 : i32
    return %c0_i32, %c0_i32_0 : i32, i32
  }
  func.func @transform_2(%arg0: i32) -> (i32, i32) {
    %c0_i32 = arith.constant 0 : i32
    %c0_i32_0 = arith.constant 0 : i32
    %c0_i32_1 = arith.constant 0 : i32
    return %c0_i32, %c0_i32_0 : i32, i32
  }
  func.func @transform_3(%arg0: i32) -> (i32, i32) {
    %c0_i32 = arith.constant 0 : i32
    %c0_i32_0 = arith.constant 0 : i32
    %c0_i32_1 = arith.constant 0 : i32
    return %c0_i32, %c0_i32_0 : i32, i32
  }
  func.func @transform_4(%arg0: i32) -> (i32, i32) {
    %c0_i32 = arith.constant 0 : i32
    %c0_i32_0 = arith.constant 0 : i32
    %c0_i32_1 = arith.constant 0 : i32
    return %c0_i32, %c0_i32_0 : i32, i32
  }
  func.func @transform_5(%arg0: i32) -> (i32, i32) {
    %c0_i32 = arith.constant 0 : i32
    %c0_i32_0 = arith.constant 0 : i32
    %c0_i32_1 = arith.constant 0 : i32
    return %c0_i32, %c0_i32_0 : i32, i32
  }
  func.func @transform_6(%arg0: i32) -> (i32, i32) {
    %c0_i32 = arith.constant 0 : i32
    %c0_i32_0 = arith.constant 0 : i32
    %c0_i32_1 = arith.constant 0 : i32
    return %c0_i32, %c0_i32_0 : i32, i32
  }
  func.func @transform_7(%arg0: i32) -> (i32, i32) {
    %c0_i32 = arith.constant 0 : i32
    %c0_i32_0 = arith.constant 0 : i32
    %c0_i32_1 = arith.constant 0 : i32
    return %c0_i32, %c0_i32_0 : i32, i32
  }
  func.func @transform_8(%arg0: i32) -> (i32, i32) {
    %c0_i32 = arith.constant 0 : i32
    %c0_i32_0 = arith.constant 0 : i32
    %c0_i32_1 = arith.constant 0 : i32
    return %c0_i32, %c0_i32_0 : i32, i32
  }
  func.func @transform_9(%arg0: i32) -> (i32, i32, i32) {
    %c0_i32 = arith.constant 0 : i32
    %c0_i32_0 = arith.constant 0 : i32
    %c0_i32_1 = arith.constant 0 : i32
    return %arg0, %c0_i32, %c0_i32_0 : i32, i32, i32
  }
}

</mosaic_0001>

<llo_original>
// kernel: tpu_custom_call.1
$region0: #{tpu_custom_call.1}
  #allocation0 [shape = 'u32[]', space=smem, size = 0x4, offset = 0x4, fixed_abs, tag = 'smem constant byte address 0x4 - core index']
  #allocation1 [shape = 'u32[144,128]{1,0:T(1,128)}', space=vmem, size = 0x12000, scoped, tag = 'internal scratch']
  %s0 = inlined_call_operand.vmem [shape: f32[2,4,256], index: 0, kind: input, shape index: {}]
  %s1 = inlined_call_operand.vmem [shape: f32[4,4], index: 1, kind: input, shape index: {}]
  %s2 = inlined_call_operand.vmem [shape: f32[4,1], index: 2, kind: input, shape index: {}]
  %s3 = inlined_call_operand.vmem [shape: f32[16,4], index: 3, kind: input, shape index: {}]
  %s4 = inlined_call_operand.vmem [shape: f32[4,16], index: 4, kind: input, shape index: {}]
  %s5 = inlined_call_operand.vmem [shape: f32[4,4], index: 5, kind: input, shape index: {}]
  %s6 = inlined_call_operand.vmem [shape: f32[4,4], index: 6, kind: input, shape index: {}]
  %s7 = inlined_call_operand.vmem [shape: f32[4,1], index: 7, kind: input, shape index: {}]
  %s8 = inlined_call_operand.vmem [shape: f32[4,1], index: 8, kind: input, shape index: {}]
  %s9 = inlined_call_operand.hbm [shape: f32[2,4,256], index: 9, kind: output, shape index: {}]
  %s10 = sld [smem:[#allocation0]]
  $region69: #{tpu_custom_call.1} parent=0
    _
  %s12 = ssub.s32 1, %s10
  %s13 = scalar_select 0, %s12, %s10
  $region1: #{tpu_custom_call.1} parent=0
    #allocation2 [shape = 'u8[8192]{0}', space=vmem, size = 0x2000, scoped, tag = 'output window, operand 0']
    #allocation3 [shape = 's32[2]{0}', space=sflag, size = 0x8, scoped, tag = 'scoped memory for tpu_custom_call.1']
    %14 = vsyncpa [#allocation3], 0
    %s15 = scalar_lea.sflag [#allocation3], 1
    %16 = vsyncpa %s15, 0
    loop: start=0, step=1, limit=4
    $region2: #{tpu_custom_call.1} parent=1 // loop_pre_header
      _
    $region3: #{tpu_custom_call.1} parent=1 // loop_header
      %s18 = sphi 0, %s22
      %p19 = scmp.ge.s32.totalorder %s18, 4
      %s28 = sphi 0, %s30
      %s31 = sphi 0, %s28
      %s32 = sphi 0, %s31
      %s48 = sphi 0, %s32
      %s52 = sphi 0, %s52
      %s54 = sphi 0, %s52
      %s55 = sphi 0, %s54
      %s69 = sphi 0, %s55
      %s73 = sphi 0, %s73
      %s75 = sphi 0, %s73
      %s76 = sphi 0, %s75
      %s90 = sphi 0, %s76
      %s94 = sphi 0, %s94
      %s96 = sphi 0, %s94
      %s97 = sphi 0, %s96
      %s111 = sphi 0, %s97
      %s115 = sphi 0, %s115
      %s117 = sphi 0, %s115
      %s118 = sphi 0, %s117
      %s132 = sphi 0, %s118
      %s136 = sphi 0, %s136
      %s138 = sphi 0, %s136
      %s139 = sphi 0, %s138
      %s153 = sphi 0, %s139
      %s157 = sphi 0, %s157
      %s159 = sphi 0, %s157
      %s160 = sphi 0, %s159
      %s174 = sphi 0, %s160
      %s178 = sphi 0, %s178
      %s180 = sphi 0, %s178
      %s181 = sphi 0, %s180
      %s195 = sphi 0, %s181
      %s199 = sphi 0, %s199
      %s201 = sphi 0, %s199
      %s202 = sphi 0, %s201
      %s216 = sphi 0, %s202
      %s222 = sphi 0, %s224
      %s225 = sphi 0, %s222
      %s226 = sphi 0, %s225
      %s242 = sphi 0, %s226
    $region4: #{tpu_custom_call.1} parent=1 // loop_header_branch
      %21 = sbr.rel (%p19) target = $region8
    $region5: #{tpu_custom_call.1} parent=1 // loop_body
      %s23 = ssub.s32 %s18, 1
      %s24 = ssub.s32 %s18, 2
      %s25 = sadd.s32 %s18, 1
      %s26 = ssub.s32 %s18, %s25
      %p27 = scmp.eq.s32.totalorder %s26, 0
      %s29 = sadd.s32 %s28, 1
      %s30 = scalar_select %p27, %s28, %s29
      %p33 = pneg %p27
      %p34 = scmp.eq.s32.totalorder %s18, 1
      %p35 = por %p33, %p34
      %p36 = scmp.ne.s32.totalorder %s28, %s31
      %p37 = scmp.eq.s32.totalorder %s18, 0
      %p38 = por %p36, %p37
      %p39 = scmp.ne.s32.totalorder %s28, %s31
      %p40 = scmp.eq.s32.totalorder %s23, 1
      %p41 = por %p39, %p40
      %p42 = scmp.ne.s32.totalorder %s31, %s32
      %p43 = scmp.eq.s32.totalorder %s23, 0
      %p44 = por %p42, %p43
      %p45 = scmp.ne.s32.totalorder %s31, %s32
      %p46 = scmp.eq.s32.totalorder %s24, 1
      %p47 = por %p45, %p46
      %p49 = scmp.ne.s32.totalorder %s32, %s48
      %p50 = scmp.eq.s32.totalorder %s24, 0
      %p51 = por %p49, %p50
      %s53 = sadd.s32 %s52, 1
      %p56 = scmp.eq.s32.totalorder %s18, 1
      %p57 = scmp.ne.s32.totalorder %s52, %s54
      %p58 = scmp.eq.s32.totalorder %s18, 0
      %p59 = por %p57, %p58
      %p60 = scmp.ne.s32.totalorder %s52, %s54
      %p61 = scmp.eq.s32.totalorder %s23, 1
      %p62 = por %p60, %p61
      %p63 = scmp.ne.s32.totalorder %s54, %s55
      %p64 = scmp.eq.s32.totalorder %s23, 0
      %p65 = por %p63, %p64
      %p66 = scmp.ne.s32.totalorder %s54, %s55
      %p67 = scmp.eq.s32.totalorder %s24, 1
      %p68 = por %p66, %p67
      %p70 = scmp.ne.s32.totalorder %s55, %s69
      %p71 = scmp.eq.s32.totalorder %s24, 0
      %p72 = por %p70, %p71
      %s74 = sadd.s32 %s73, 1
      %p77 = scmp.eq.s32.totalorder %s18, 1
      %p78 = scmp.ne.s32.totalorder %s73, %s75
      %p79 = scmp.eq.s32.totalorder %s18, 0
      %p80 = por %p78, %p79
      %p81 = scmp.ne.s32.totalorder %s73, %s75
      %p82 = scmp.eq.s32.totalorder %s23, 1
      %p83 = por %p81, %p82
      %p84 = scmp.ne.s32.totalorder %s75, %s76
      %p85 = scmp.eq.s32.totalorder %s23, 0
      %p86 = por %p84, %p85
      %p87 = scmp.ne.s32.totalorder %s75, %s76
      %p88 = scmp.eq.s32.totalorder %s24, 1
      %p89 = por %p87, %p88
      %p91 = scmp.ne.s32.totalorder %s76, %s90
      %p92 = scmp.eq.s32.totalorder %s24, 0
      %p93 = por %p91, %p92
      %s95 = sadd.s32 %s94, 1
      %p98 = scmp.eq.s32.totalorder %s18, 1
      %p99 = scmp.ne.s32.totalorder %s94, %s96
      %p100 = scmp.eq.s32.totalorder %s18, 0
      %p101 = por %p99, %p100
      %p102 = scmp.ne.s32.totalorder %s94, %s96
      %p103 = scmp.eq.s32.totalorder %s23, 1
      %p104 = por %p102, %p103
      %p105 = scmp.ne.s32.totalorder %s96, %s97
      %p106 = scmp.eq.s32.totalorder %s23, 0
      %p107 = por %p105, %p106
      %p108 = scmp.ne.s32.totalorder %s96, %s97
      %p109 = scmp.eq.s32.totalorder %s24, 1
      %p110 = por %p108, %p109
      %p112 = scmp.ne.s32.totalorder %s97, %s111
      %p113 = scmp.eq.s32.totalorder %s24, 0
      %p114 = por %p112, %p113
      %s116 = sadd.s32 %s115, 1
      %p119 = scmp.eq.s32.totalorder %s18, 1
      %p120 = scmp.ne.s32.totalorder %s115, %s117
      %p121 = scmp.eq.s32.totalorder %s18, 0
      %p122 = por %p120, %p121
      %p123 = scmp.ne.s32.totalorder %s115, %s117
      %p124 = scmp.eq.s32.totalorder %s23, 1
      %p125 = por %p123, %p124
      %p126 = scmp.ne.s32.totalorder %s117, %s118
      %p127 = scmp.eq.s32.totalorder %s23, 0
      %p128 = por %p126, %p127
      %p129 = scmp.ne.s32.totalorder %s117, %s118
      %p130 = scmp.eq.s32.totalorder %s24, 1
      %p131 = por %p129, %p130
      %p133 = scmp.ne.s32.totalorder %s118, %s132
      %p134 = scmp.eq.s32.totalorder %s24, 0
      %p135 = por %p133, %p134
      %s137 = sadd.s32 %s136, 1
      %p140 = scmp.eq.s32.totalorder %s18, 1
      %p141 = scmp.ne.s32.totalorder %s136, %s138
      %p142 = scmp.eq.s32.totalorder %s18, 0
      %p143 = por %p141, %p142
      %p144 = scmp.ne.s32.totalorder %s136, %s138
      %p145 = scmp.eq.s32.totalorder %s23, 1
      %p146 = por %p144, %p145
      %p147 = scmp.ne.s32.totalorder %s138, %s139
      %p148 = scmp.eq.s32.totalorder %s23, 0
      %p149 = por %p147, %p148
      %p150 = scmp.ne.s32.totalorder %s138, %s139
      %p151 = scmp.eq.s32.totalorder %s24, 1
      %p152 = por %p150, %p151
      %p154 = scmp.ne.s32.totalorder %s139, %s153
      %p155 = scmp.eq.s32.totalorder %s24, 0
      %p156 = por %p154, %p155
      %s158 = sadd.s32 %s157, 1
      %p161 = scmp.eq.s32.totalorder %s18, 1
      %p162 = scmp.ne.s32.totalorder %s157, %s159
      %p163 = scmp.eq.s32.totalorder %s18, 0
      %p164 = por %p162, %p163
      %p165 = scmp.ne.s32.totalorder %s157, %s159
      %p166 = scmp.eq.s32.totalorder %s23, 1
      %p167 = por %p165, %p166
      %p168 = scmp.ne.s32.totalorder %s159, %s160
      %p169 = scmp.eq.s32.totalorder %s23, 0
      %p170 = por %p168, %p169
      %p171 = scmp.ne.s32.totalorder %s159, %s160
      %p172 = scmp.eq.s32.totalorder %s24, 1
      %p173 = por %p171, %p172
      %p175 = scmp.ne.s32.totalorder %s160, %s174
      %p176 = scmp.eq.s32.totalorder %s24, 0
      %p177 = por %p175, %p176
      %s179 = sadd.s32 %s178, 1
      %p182 = scmp.eq.s32.totalorder %s18, 1
      %p183 = scmp.ne.s32.totalorder %s178, %s180
      %p184 = scmp.eq.s32.totalorder %s18, 0
      %p185 = por %p183, %p184
      %p186 = scmp.ne.s32.totalorder %s178, %s180
      %p187 = scmp.eq.s32.totalorder %s23, 1
      %p188 = por %p186, %p187
      %p189 = scmp.ne.s32.totalorder %s180, %s181
      %p190 = scmp.eq.s32.totalorder %s23, 0
      %p191 = por %p189, %p190
      %p192 = scmp.ne.s32.totalorder %s180, %s181
      %p193 = scmp.eq.s32.totalorder %s24, 1
      %p194 = por %p192, %p193
      %p196 = scmp.ne.s32.totalorder %s181, %s195
      %p197 = scmp.eq.s32.totalorder %s24, 0
      %p198 = por %p196, %p197
      %s200 = sadd.s32 %s199, 1
      %p203 = scmp.eq.s32.totalorder %s18, 1
      %p204 = scmp.ne.s32.totalorder %s199, %s201
      %p205 = scmp.eq.s32.totalorder %s18, 0
      %p206 = por %p204, %p205
      %p207 = scmp.ne.s32.totalorder %s199, %s201
      %p208 = scmp.eq.s32.totalorder %s23, 1
      %p209 = por %p207, %p208
      %p210 = scmp.ne.s32.totalorder %s201, %s202
      %p211 = scmp.eq.s32.totalorder %s23, 0
      %p212 = por %p210, %p211
      %p213 = scmp.ne.s32.totalorder %s201, %s202
      %p214 = scmp.eq.s32.totalorder %s24, 1
      %p215 = por %p213, %p214
      %p217 = scmp.ne.s32.totalorder %s202, %s216
      %p218 = scmp.eq.s32.totalorder %s24, 0
      %p219 = por %p217, %p218
      %s220 = ssub.s32 %s18, %s25
      %p221 = scmp.eq.s32.totalorder %s220, 0
      %s223 = sadd.s32 %s222, 1
      %s224 = scalar_select %p221, %s222, %s223
      %p227 = pneg %p221
      %p228 = scmp.eq.s32.totalorder %s18, 1
      %p229 = por %p227, %p228
      %p230 = scmp.ne.s32.totalorder %s222, %s225
      %p231 = scmp.eq.s32.totalorder %s18, 0
      %p232 = por %p230, %p231
      %p233 = scmp.ne.s32.totalorder %s222, %s225
      %p234 = scmp.eq.s32.totalorder %s23, 1
      %p235 = por %p233, %p234
      %p236 = scmp.ne.s32.totalorder %s225, %s226
      %p237 = scmp.eq.s32.totalorder %s23, 0
      %p238 = por %p236, %p237
      %p239 = scmp.ne.s32.totalorder %s225, %s226
      %p240 = scmp.eq.s32.totalorder %s24, 1
      %p241 = por %p239, %p240
      %p243 = scmp.ne.s32.totalorder %s226, %s242
      %p244 = scmp.eq.s32.totalorder %s24, 0
      %p245 = por %p243, %p244
      %p246 = scmp.le.s32.totalorder 1, %s18
      %p247 = scmp.lt.s32.totalorder %s18, 3
      %p248 = pnand %p246, %p247
      %p249 = pneg %p248
      // Predicated region
      $region9: #{tpu_custom_call.1} parent=5 // pred_check
        _
      $region10: #{tpu_custom_call.1} parent=5 // pred_check_branch
        %251 = sbr.rel (%p248) target = $region12
      $region11: #{tpu_custom_call.1} parent=5 // pred_region
        %s252 = ssub.s32 %s18, 1
        // Predicated region
        $region13: #{tpu_custom_call.1} parent=11 // pred_check
          %p253 = pneg %p65
        $region14: #{tpu_custom_call.1} parent=11 // pred_check_branch
          %255 = sbr.rel (%p253) target = $region16
        $region15: #{tpu_custom_call.1} parent=11 // pred_region
          _
        $region16: #{tpu_custom_call.1} parent=11 // pred_fallthru
          _
        // Predicated region
        $region17: #{tpu_custom_call.1} parent=11 // pred_check
          %p256 = pneg %p86
        $region18: #{tpu_custom_call.1} parent=11 // pred_check_branch
          %258 = sbr.rel (%p256) target = $region20
        $region19: #{tpu_custom_call.1} parent=11 // pred_region
          _
        $region20: #{tpu_custom_call.1} parent=11 // pred_fallthru
          _
        // Predicated region
        $region21: #{tpu_custom_call.1} parent=11 // pred_check
          %p259 = pneg %p107
        $region22: #{tpu_custom_call.1} parent=11 // pred_check_branch
          %261 = sbr.rel (%p259) target = $region24
        $region23: #{tpu_custom_call.1} parent=11 // pred_region
          _
        $region24: #{tpu_custom_call.1} parent=11 // pred_fallthru
          _
        // Predicated region
        $region25: #{tpu_custom_call.1} parent=11 // pred_check
          %p262 = pneg %p128
        $region26: #{tpu_custom_call.1} parent=11 // pred_check_branch
          %264 = sbr.rel (%p262) target = $region28
        $region27: #{tpu_custom_call.1} parent=11 // pred_region
          _
        $region28: #{tpu_custom_call.1} parent=11 // pred_fallthru
          _
        // Predicated region
        $region29: #{tpu_custom_call.1} parent=11 // pred_check
          %p265 = pneg %p149
        $region30: #{tpu_custom_call.1} parent=11 // pred_check_branch
          %267 = sbr.rel (%p265) target = $region32
        $region31: #{tpu_custom_call.1} parent=11 // pred_region
          _
        $region32: #{tpu_custom_call.1} parent=11 // pred_fallthru
          _
        // Predicated region
        $region33: #{tpu_custom_call.1} parent=11 // pred_check
          %p268 = pneg %p170
        $region34: #{tpu_custom_call.1} parent=11 // pred_check_branch
          %270 = sbr.rel (%p268) target = $region36
        $region35: #{tpu_custom_call.1} parent=11 // pred_region
          _
        $region36: #{tpu_custom_call.1} parent=11 // pred_fallthru
          _
        // Predicated region
        $region37: #{tpu_custom_call.1} parent=11 // pred_check
          %p271 = pneg %p191
        $region38: #{tpu_custom_call.1} parent=11 // pred_check_branch
          %273 = sbr.rel (%p271) target = $region40
        $region39: #{tpu_custom_call.1} parent=11 // pred_region
          _
        $region40: #{tpu_custom_call.1} parent=11 // pred_fallthru
          _
        // Predicated region
        $region41: #{tpu_custom_call.1} parent=11 // pred_check
          %p274 = pneg %p212
        $region42: #{tpu_custom_call.1} parent=11 // pred_check_branch
          %276 = sbr.rel (%p274) target = $region44
        $region43: #{tpu_custom_call.1} parent=11 // pred_region
          _
        $region44: #{tpu_custom_call.1} parent=11 // pred_fallthru
          _
      $region12: #{tpu_custom_call.1} parent=5 // pred_fallthru
        _
      %p277 = scmp.lt.s32.totalorder %s18, 2
      // Predicated region
      $region45: #{tpu_custom_call.1} parent=5 // pred_check
        %p278 = pneg %p277
      $region46: #{tpu_custom_call.1} parent=5 // pred_check_branch
        %280 = sbr.rel (%p278) target = $region48
      $region47: #{tpu_custom_call.1} parent=5 // pred_region
        // Predicated region
        $region49: #{tpu_custom_call.1} parent=47 // pred_check
          %p281 = pneg %p38
        $region50: #{tpu_custom_call.1} parent=47 // pred_check_branch
          %283 = sbr.rel (%p281) target = $region52
        $region51: #{tpu_custom_call.1} parent=47 // pred_region
          %p284 = scmp.lt.s32.totalorder %s18, 1
          %s285 = scalar_select %p284, %s18, 1
          %s286 = smul.addr %s285, 2
          %s287 = smul.addr %s286, 4
          %s288 = scalar_lea.vmem %s0, %s287
        $region52: #{tpu_custom_call.1} parent=47 // pred_fallthru
          _
      $region48: #{tpu_custom_call.1} parent=5 // pred_fallthru
        _
      %p289 = scmp.le.s32.totalorder 1, %s18
      %p290 = scmp.lt.s32.totalorder %s18, 3
      %p291 = pnand %p289, %p290
      %p292 = pneg %p291
      // Predicated region
      $region53: #{tpu_custom_call.1} parent=5 // pred_check
        _
      $region54: #{tpu_custom_call.1} parent=5 // pred_check_branch
        %294 = sbr.rel (%p291) target = $region56
      $region55: #{tpu_custom_call.1} parent=5 // pred_region
        %s295 = ssub.s32 %s18, 1
        %p296 = scmp.lt.s32.totalorder %s23, 1
        %s297 = scalar_select %p296, %s23, 1
        %s298 = smul.addr %s297, 2
        %s299 = smul.addr %s298, 4
        %s300 = scalar_lea.vmem %s0, %s299
        %p301 = pneg %p44
        %p302 = pneg %p41
        %p303 = pneg %p65
        %p304 = pneg %p62
        %p305 = pneg %p86
        %p306 = pneg %p83
        %p307 = pneg %p107
        %p308 = pneg %p104
        %p309 = pneg %p128
        %p310 = pneg %p125
        %p311 = pneg %p149
        %p312 = pneg %p146
        %p313 = pneg %p170
        %p314 = pneg %p167
        %p315 = pneg %p191
        %p316 = pneg %p188
        %p317 = pneg %p212
        %p318 = pneg %p209
        %p319 = pneg %p238
        %p320 = pneg %p235
        %s321 = sand.u32 %s225, 1
        %s322 = scalar_lea.sflag [#allocation3], %s321
        %s323 = sand.u32 %s225, 1
        %s324 = smul.addr %s323, 8
        %s325 = scalar_lea.vmem [#allocation2], %s324
        %p326 = scmp.lt.s32.totalorder %s23, 1
        %s327 = scalar_select %p326, %s23, 1
        %s328 = smul.addr %s327, 2
        %s329 = smul.addr %s328, 4
        %s330 = scalar_lea.vmem %s0, %s329
        %v331 = vld [vmem:[%s330] sm:$0xff]
        %v332 = vld [vmem:[%s1] sm:$0xf]
        %v333 = vld [vmem:[%s2] sm:$0xf]
        %v334 = vld [vmem:[%s3] sm:$0xff]
        %v335 = vld [vmem:[%s3 + $0x8] sm:$0xff]
        %v336 = vld [vmem:[%s4] sm:$0xf]
        %v337 = vld [vmem:[%s5] sm:$0xf]
        %v338 = vld [vmem:[%s6] sm:$0xf]
        %v339 = vld [vmem:[%s7] sm:$0xf]
        %v340 = vld [vmem:[%s8] sm:$0xf]
        %342 = vset.pattern.permute.xlu0 0
        %343 = vperm.xlu0 %342, %v333
        %v344 = vpop.permute.xlu0 %343
        %v347 = vcombine.high %v331, %v331
        %vm348 = vcmask 31744
        %v350 = vsel %vm348, %v332, 0
        %vm352 = vcmask 1043456
        %v353 = vsel %vm352, %v331, 0
        %v355 = vsel %vm352, %v347, 0
        %357 = vmatprep.subr.mxu0 0.0
        %358 = vmatpush1.msra.mxu0 0.0
        %359 = vmatprep.subr.mxu0 0.0
        %360 = vmatpush1.msra.mxu0 0.0
        %361 = vmatprep.subr.mxu0 0.0
        %362 = vmatpush1.msra.mxu0 0.0
        %363 = vmatprep.subr.mxu0 0.0
        %364 = vmatpush1.msra.mxu0 0.0
        %365 = vmatprep.subr.mxu0 0.0
        %366 = vmatpush1.msra.mxu0 0.0
        %367 = vmatprep.subr.mxu0 0.0
        %368 = vmatpush1.msra.mxu0 0.0
        %369 = vmatprep.subr.mxu0 0.0
        %370 = vmatpush1.msra.mxu0 0.0
        %371 = vmatprep.subr.mxu0 0.0
        %372 = vmatpush1.msra.mxu0 0.0
        %373 = vmatprep.subr.mxu0 0.0
        %374 = vmatpush1.msra.mxu0 0.0
        %375 = vmatprep.subr.mxu0 0.0
        %376 = vmatpush1.msra.mxu0 0.0
        %377 = vmatprep.subr.mxu0 0.0
        %378 = vmatpush1.msra.mxu0 0.0
        %379 = vmatprep.subr.mxu0 0.0
        %380 = vmatpush1.msra.mxu0 0.0
        %381 = vmatprep.subr.mxu0 0.0
        %382 = vmatpush1.msra.mxu0 0.0
        %383 = vmatprep.subr.mxu0 0.0
        %384 = vmatpush1.msra.mxu0 0.0
        %385 = vmatprep.subr.mxu0 0.0
        %386 = vmatpush1.msra.mxu0 0.0
        %387 = vmatprep.subr.mxu0 %v355
        %388 = vmatpush1.msra.mxu0 %v353
        %389 = vmatprep.subr.mxu0 0.0
        %390 = vmatpush2.msra.mxu0 0.0
        %391 = vmatprep.subr.mxu0 0.0
        %392 = vmatpush2.msra.mxu0 0.0
        %393 = vmatprep.subr.mxu0 0.0
        %394 = vmatpush2.msra.mxu0 0.0
        %395 = vmatprep.subr.mxu0 0.0
        %396 = vmatpush2.msra.mxu0 0.0
        %397 = vmatprep.subr.mxu0 0.0
        %398 = vmatpush2.msra.mxu0 0.0
        %399 = vmatprep.subr.mxu0 0.0
        %400 = vmatpush2.msra.mxu0 0.0
        %401 = vmatprep.subr.mxu0 0.0
        %402 = vmatpush2.msra.mxu0 0.0
        %403 = vmatprep.subr.mxu0 0.0
        %404 = vmatpush2.msra.mxu0 0.0
        %405 = vmatprep.subr.mxu0 0.0
        %406 = vmatpush2.msra.mxu0 0.0
        %407 = vmatprep.subr.mxu0 0.0
        %408 = vmatpush2.msra.mxu0 0.0
        %409 = vmatprep.subr.mxu0 0.0
        %410 = vmatpush2.msra.mxu0 0.0
        %411 = vmatprep.subr.mxu0 0.0
        %412 = vmatpush2.msra.mxu0 0.0
        %413 = vmatprep.subr.mxu0 0.0
        %414 = vmatpush2.msra.mxu0 0.0
        %415 = vmatprep.subr.mxu0 0.0
        %416 = vmatpush2.msra.mxu0 0.0
        %417 = vmatprep.subr.mxu0 0.0
        %418 = vmatpush2.msra.mxu0 0.0
        %419 = vmatprep.subr.mxu0 0.0
        %420 = vmatpush2.msra.mxu0 0.0
        %421 = vmatprep.mubr.f32.mxu0 0.0
        %422 = vmatmul.mubr.f32.gmra.mxu0 %v350
        %v423 = vpop.f32.mrf.mxu0
        %v424 = vadd.f32 %v344, %v423
        %v425 = vpop.f32.mrf.mxu0
        %v426 = vadd.f32 %v344, %v425
        %427 = vdwg.mxu0
        %v429 = vsel %vm348, %v334, 0
        %v432 = vsel %vm348, %v335, 0
        %v435 = vsel %vm352, %v424, 0
        %v438 = vsel %vm352, %v426, 0
        %440 = vmatprep.subr.mxu0 0.0
        %441 = vmatpush1.msra.mxu0 0.0
        %442 = vmatprep.subr.mxu0 0.0
        %443 = vmatpush1.msra.mxu0 0.0
        %444 = vmatprep.subr.mxu0 0.0
        %445 = vmatpush1.msra.mxu0 0.0
        %446 = vmatprep.subr.mxu0 0.0
        %447 = vmatpush1.msra.mxu0 0.0
        %448 = vmatprep.subr.mxu0 0.0
        %449 = vmatpush1.msra.mxu0 0.0
        %450 = vmatprep.subr.mxu0 0.0
        %451 = vmatpush1.msra.mxu0 0.0
        %452 = vmatprep.subr.mxu0 0.0
        %453 = vmatpush1.msra.mxu0 0.0
        %454 = vmatprep.subr.mxu0 0.0
        %455 = vmatpush1.msra.mxu0 0.0
        %456 = vmatprep.subr.mxu0 0.0
        %457 = vmatpush1.msra.mxu0 0.0
        %458 = vmatprep.subr.mxu0 0.0
        %459 = vmatpush1.msra.mxu0 0.0
        %460 = vmatprep.subr.mxu0 0.0
        %461 = vmatpush1.msra.mxu0 0.0
        %462 = vmatprep.subr.mxu0 0.0
        %463 = vmatpush1.msra.mxu0 0.0
        %464 = vmatprep.subr.mxu0 0.0
        %465 = vmatpush1.msra.mxu0 0.0
        %466 = vmatprep.subr.mxu0 0.0
        %467 = vmatpush1.msra.mxu0 0.0
        %468 = vmatprep.subr.mxu0 0.0
        %469 = vmatpush1.msra.mxu0 0.0
        %470 = vmatprep.subr.mxu0 %v438
        %471 = vmatpush1.msra.mxu0 %v435
        %472 = vmatprep.subr.mxu0 0.0
        %473 = vmatpush2.msra.mxu0 0.0
        %474 = vmatprep.subr.mxu0 0.0
        %475 = vmatpush2.msra.mxu0 0.0
        %476 = vmatprep.subr.mxu0 0.0
        %477 = vmatpush2.msra.mxu0 0.0
        %478 = vmatprep.subr.mxu0 0.0
        %479 = vmatpush2.msra.mxu0 0.0
        %480 = vmatprep.subr.mxu0 0.0
        %481 = vmatpush2.msra.mxu0 0.0
        %482 = vmatprep.subr.mxu0 0.0
        %483 = vmatpush2.msra.mxu0 0.0
        %484 = vmatprep.subr.mxu0 0.0
        %485 = vmatpush2.msra.mxu0 0.0
        %486 = vmatprep.subr.mxu0 0.0
        %487 = vmatpush2.msra.mxu0 0.0
        %488 = vmatprep.subr.mxu0 0.0
        %489 = vmatpush2.msra.mxu0 0.0
        %490 = vmatprep.subr.mxu0 0.0
        %491 = vmatpush2.msra.mxu0 0.0
        %492 = vmatprep.subr.mxu0 0.0
        %493 = vmatpush2.msra.mxu0 0.0
        %494 = vmatprep.subr.mxu0 0.0
        %495 = vmatpush2.msra.mxu0 0.0
        %496 = vmatprep.subr.mxu0 0.0
        %497 = vmatpush2.msra.mxu0 0.0
        %498 = vmatprep.subr.mxu0 0.0
        %499 = vmatpush2.msra.mxu0 0.0
        %500 = vmatprep.subr.mxu0 0.0
        %501 = vmatpush2.msra.mxu0 0.0
        %502 = vmatprep.subr.mxu0 0.0
        %503 = vmatpush2.msra.mxu0 0.0
        %504 = vmatprep.mubr.f32.mxu0 0.0
        %505 = vmatmul.mubr.f32.gmra.mxu0 %v429
        %v506 = vpop.f32.mrf.mxu0
        %v507 = vadd.f32 0.0, %v506
        %v508 = vpop.f32.mrf.mxu0
        %v509 = vadd.f32 0.0, %v508
        %510 = vmatprep.mubr.f32.mxu0 0.0
        %511 = vmatmul.mubr.f32.gmra.mxu0 %v432
        %v512 = vpop.f32.mrf.mxu0
        %v513 = vadd.f32 0.0, %v512
        %v514 = vpop.f32.mrf.mxu0
        %v515 = vadd.f32 0.0, %v514
        %516 = vdwg.mxu0
        %v517 = vmax.f32 %v507, %v509
        %518 = vmax.xlane.f32.xlu0 %v517
        %v519 = vpop.xlane.xlu0 %518
        %v520 = vmax.f32 %v513, %v515
        %521 = vmax.xlane.f32.xlu0 %v520
        %v522 = vpop.xlane.xlu0 %521
        %v523 = vsub.f32 %v507, %v519
        %v524 = vsub.f32 %v509, %v519
        %v525 = vsub.f32 %v513, %v522
        %v526 = vsub.f32 %v515, %v522
        %v527 = vmul.f32 %v523, 1.442695
        %v528 = vpow.pop %v527
        %v529 = vmul.f32 %v524, 1.442695
        %v530 = vpow.pop %v529
        %v531 = vmul.f32 %v525, 1.442695
        %v532 = vpow.pop %v531
        %v533 = vmul.f32 %v526, 1.442695
        %v534 = vpow.pop %v533
        %v535 = vadd.f32 %v528, %v530
        %536 = vadd.xlane.f32.xlu0 %v535
        %v537 = vpop.xlane.xlu0 %536
        %v538 = vadd.f32 %v532, %v534
        %539 = vadd.xlane.f32.xlu0 %v538
        %v540 = vpop.xlane.xlu0 %539
        %v541 = vrcp.pop %v537
        %v542 = vmul.f32 %v528, %v541
        %v543 = vmul.f32 %v530, %v541
        %v544 = vrcp.pop %v540
        %v545 = vmul.f32 %v532, %v544
        %v546 = vmul.f32 %v534, %v544
        %v547 = vadd.f32 %v542, %v545
        %v548 = vrot.slane %v547, 4
        %v549 = vadd.f32 %v547, %v548
        %v550 = vrot.slane %v549, 2
        %v551 = vadd.f32 %v549, %v550
        %v552 = vrot.slane %v551, 1
        %v553 = vadd.f32 %v551, %v552
        %v554 = vadd.f32 %v543, %v546
        %v555 = vrot.slane %v554, 4
        %v556 = vadd.f32 %v554, %v555
        %v557 = vrot.slane %v556, 2
        %v558 = vadd.f32 %v556, %v557
        %v559 = vrot.slane %v558, 1
        %v560 = vadd.f32 %v558, %v559
        %v561 = vadd.f32 %v553, 1e-09
        %v562 = vadd.f32 %v560, 1e-09
        %v563 = vrcp.pop %v561
        %v564 = vmul.f32 %v542, %v563
        %v565 = vrcp.pop %v562
        %v566 = vmul.f32 %v543, %v565
        %v567 = vmul.f32 %v545, %v563
        %v568 = vmul.f32 %v546, %v565
        %vm569 = vcmask 130048
        %v571 = vsel %vm569, %v336, 0
        %573 = vmatprep.subr.mxu0 0.0
        %574 = vmatpush1.msra.mxu0 0.0
        %575 = vmatprep.subr.mxu0 0.0
        %576 = vmatpush1.msra.mxu0 0.0
        %577 = vmatprep.subr.mxu0 0.0
        %578 = vmatpush1.msra.mxu0 0.0
        %579 = vmatprep.subr.mxu0 0.0
        %580 = vmatpush1.msra.mxu0 0.0
        %581 = vmatprep.subr.mxu0 0.0
        %582 = vmatpush1.msra.mxu0 0.0
        %583 = vmatprep.subr.mxu0 0.0
        %584 = vmatpush1.msra.mxu0 0.0
        %585 = vmatprep.subr.mxu0 0.0
        %586 = vmatpush1.msra.mxu0 0.0
        %587 = vmatprep.subr.mxu0 0.0
        %588 = vmatpush1.msra.mxu0 0.0
        %589 = vmatprep.subr.mxu0 0.0
        %590 = vmatpush1.msra.mxu0 0.0
        %591 = vmatprep.subr.mxu0 0.0
        %592 = vmatpush1.msra.mxu0 0.0
        %593 = vmatprep.subr.mxu0 0.0
        %594 = vmatpush1.msra.mxu0 0.0
        %595 = vmatprep.subr.mxu0 0.0
        %596 = vmatpush1.msra.mxu0 0.0
        %597 = vmatprep.subr.mxu0 0.0
        %598 = vmatpush1.msra.mxu0 0.0
        %599 = vmatprep.subr.mxu0 0.0
        %600 = vmatpush1.msra.mxu0 0.0
        %601 = vmatprep.subr.mxu0 %v568
        %602 = vmatpush1.msra.mxu0 %v567
        %603 = vmatprep.subr.mxu0 %v566
        %604 = vmatpush1.msra.mxu0 %v564
        %605 = vmatprep.subr.mxu0 0.0
        %606 = vmatpush2.msra.mxu0 0.0
        %607 = vmatprep.subr.mxu0 0.0
        %608 = vmatpush2.msra.mxu0 0.0
        %609 = vmatprep.subr.mxu0 0.0
        %610 = vmatpush2.msra.mxu0 0.0
        %611 = vmatprep.subr.mxu0 0.0
        %612 = vmatpush2.msra.mxu0 0.0
        %613 = vmatprep.subr.mxu0 0.0
        %614 = vmatpush2.msra.mxu0 0.0
        %615 = vmatprep.subr.mxu0 0.0
        %616 = vmatpush2.msra.mxu0 0.0
        %617 = vmatprep.subr.mxu0 0.0
        %618 = vmatpush2.msra.mxu0 0.0
        %619 = vmatprep.subr.mxu0 0.0
        %620 = vmatpush2.msra.mxu0 0.0
        %621 = vmatprep.subr.mxu0 0.0
        %622 = vmatpush2.msra.mxu0 0.0
        %623 = vmatprep.subr.mxu0 0.0
        %624 = vmatpush2.msra.mxu0 0.0
        %625 = vmatprep.subr.mxu0 0.0
        %626 = vmatpush2.msra.mxu0 0.0
        %627 = vmatprep.subr.mxu0 0.0
        %628 = vmatpush2.msra.mxu0 0.0
        %629 = vmatprep.subr.mxu0 0.0
        %630 = vmatpush2.msra.mxu0 0.0
        %631 = vmatprep.subr.mxu0 0.0
        %632 = vmatpush2.msra.mxu0 0.0
        %633 = vmatprep.subr.mxu0 0.0
        %634 = vmatpush2.msra.mxu0 0.0
        %635 = vmatprep.subr.mxu0 0.0
        %636 = vmatpush2.msra.mxu0 0.0
        %637 = vmatprep.mubr.f32.mxu0 0.0
        %638 = vmatmul.mubr.f32.gmra.mxu0 %v571
        %v639 = vpop.f32.mrf.mxu0
        %v640 = vadd.f32 0.0, %v639
        %v641 = vpop.f32.mrf.mxu0
        %v642 = vadd.f32 0.0, %v641
        %643 = vdwg.mxu0
        %v645 = vsel %vm348, %v337, 0
        %v648 = vsel %vm352, %v640, 0
        %v651 = vsel %vm352, %v642, 0
        %653 = vmatprep.subr.mxu0 0.0
        %654 = vmatpush1.msra.mxu0 0.0
        %655 = vmatprep.subr.mxu0 0.0
        %656 = vmatpush1.msra.mxu0 0.0
        %657 = vmatprep.subr.mxu0 0.0
        %658 = vmatpush1.msra.mxu0 0.0
        %659 = vmatprep.subr.mxu0 0.0
        %660 = vmatpush1.msra.mxu0 0.0
        %661 = vmatprep.subr.mxu0 0.0
        %662 = vmatpush1.msra.mxu0 0.0
        %663 = vmatprep.subr.mxu0 0.0
        %664 = vmatpush1.msra.mxu0 0.0
        %665 = vmatprep.subr.mxu0 0.0
        %666 = vmatpush1.msra.mxu0 0.0
        %667 = vmatprep.subr.mxu0 0.0
        %668 = vmatpush1.msra.mxu0 0.0
        %669 = vmatprep.subr.mxu0 0.0
        %670 = vmatpush1.msra.mxu0 0.0
        %671 = vmatprep.subr.mxu0 0.0
        %672 = vmatpush1.msra.mxu0 0.0
        %673 = vmatprep.subr.mxu0 0.0
        %674 = vmatpush1.msra.mxu0 0.0
        %675 = vmatprep.subr.mxu0 0.0
        %676 = vmatpush1.msra.mxu0 0.0
        %677 = vmatprep.subr.mxu0 0.0
        %678 = vmatpush1.msra.mxu0 0.0
        %679 = vmatprep.subr.mxu0 0.0
        %680 = vmatpush1.msra.mxu0 0.0
        %681 = vmatprep.subr.mxu0 0.0
        %682 = vmatpush1.msra.mxu0 0.0
        %683 = vmatprep.subr.mxu0 %v651
        %684 = vmatpush1.msra.mxu0 %v648
        %685 = vmatprep.subr.mxu0 0.0
        %686 = vmatpush2.msra.mxu0 0.0
        %687 = vmatprep.subr.mxu0 0.0
        %688 = vmatpush2.msra.mxu0 0.0
        %689 = vmatprep.subr.mxu0 0.0
        %690 = vmatpush2.msra.mxu0 0.0
        %691 = vmatprep.subr.mxu0 0.0
        %692 = vmatpush2.msra.mxu0 0.0
        %693 = vmatprep.subr.mxu0 0.0
        %694 = vmatpush2.msra.mxu0 0.0
        %695 = vmatprep.subr.mxu0 0.0
        %696 = vmatpush2.msra.mxu0 0.0
        %697 = vmatprep.subr.mxu0 0.0
        %698 = vmatpush2.msra.mxu0 0.0
        %699 = vmatprep.subr.mxu0 0.0
        %700 = vmatpush2.msra.mxu0 0.0
        %701 = vmatprep.subr.mxu0 0.0
        %702 = vmatpush2.msra.mxu0 0.0
        %703 = vmatprep.subr.mxu0 0.0
        %704 = vmatpush2.msra.mxu0 0.0
        %705 = vmatprep.subr.mxu0 0.0
        %706 = vmatpush2.msra.mxu0 0.0
        %707 = vmatprep.subr.mxu0 0.0
        %708 = vmatpush2.msra.mxu0 0.0
        %709 = vmatprep.subr.mxu0 0.0
        %710 = vmatpush2.msra.mxu0 0.0
        %711 = vmatprep.subr.mxu0 0.0
        %712 = vmatpush2.msra.mxu0 0.0
        %713 = vmatprep.subr.mxu0 0.0
        %714 = vmatpush2.msra.mxu0 0.0
        %715 = vmatprep.subr.mxu0 0.0
        %716 = vmatpush2.msra.mxu0 0.0
        %717 = vmatprep.mubr.f32.mxu0 0.0
        %718 = vmatmul.mubr.f32.gmra.mxu0 %v645
        %v719 = vpop.f32.mrf.mxu0
        %v720 = vadd.f32 0.0, %v719
        %v721 = vpop.f32.mrf.mxu0
        %v722 = vadd.f32 0.0, %v721
        %723 = vdwg.mxu0
        %v725 = vsel %vm348, %v338, 0
        %v728 = vsel %vm352, %v720, 0
        %v731 = vsel %vm352, %v722, 0
        %733 = vmatprep.subr.mxu0 0.0
        %734 = vmatpush1.msra.mxu0 0.0
        %735 = vmatprep.subr.mxu0 0.0
        %736 = vmatpush1.msra.mxu0 0.0
        %737 = vmatprep.subr.mxu0 0.0
        %738 = vmatpush1.msra.mxu0 0.0
        %739 = vmatprep.subr.mxu0 0.0
        %740 = vmatpush1.msra.mxu0 0.0
        %741 = vmatprep.subr.mxu0 0.0
        %742 = vmatpush1.msra.mxu0 0.0
        %743 = vmatprep.subr.mxu0 0.0
        %744 = vmatpush1.msra.mxu0 0.0
        %745 = vmatprep.subr.mxu0 0.0
        %746 = vmatpush1.msra.mxu0 0.0
        %747 = vmatprep.subr.mxu0 0.0
        %748 = vmatpush1.msra.mxu0 0.0
        %749 = vmatprep.subr.mxu0 0.0
        %750 = vmatpush1.msra.mxu0 0.0
        %751 = vmatprep.subr.mxu0 0.0
        %752 = vmatpush1.msra.mxu0 0.0
        %753 = vmatprep.subr.mxu0 0.0
        %754 = vmatpush1.msra.mxu0 0.0
        %755 = vmatprep.subr.mxu0 0.0
        %756 = vmatpush1.msra.mxu0 0.0
        %757 = vmatprep.subr.mxu0 0.0
        %758 = vmatpush1.msra.mxu0 0.0
        %759 = vmatprep.subr.mxu0 0.0
        %760 = vmatpush1.msra.mxu0 0.0
        %761 = vmatprep.subr.mxu0 0.0
        %762 = vmatpush1.msra.mxu0 0.0
        %763 = vmatprep.subr.mxu0 %v731
        %764 = vmatpush1.msra.mxu0 %v728
        %765 = vmatprep.subr.mxu0 0.0
        %766 = vmatpush2.msra.mxu0 0.0
        %767 = vmatprep.subr.mxu0 0.0
        %768 = vmatpush2.msra.mxu0 0.0
        %769 = vmatprep.subr.mxu0 0.0
        %770 = vmatpush2.msra.mxu0 0.0
        %771 = vmatprep.subr.mxu0 0.0
        %772 = vmatpush2.msra.mxu0 0.0
        %773 = vmatprep.subr.mxu0 0.0
        %774 = vmatpush2.msra.mxu0 0.0
        %775 = vmatprep.subr.mxu0 0.0
        %776 = vmatpush2.msra.mxu0 0.0
        %777 = vmatprep.subr.mxu0 0.0
        %778 = vmatpush2.msra.mxu0 0.0
        %779 = vmatprep.subr.mxu0 0.0
        %780 = vmatpush2.msra.mxu0 0.0
        %781 = vmatprep.subr.mxu0 0.0
        %782 = vmatpush2.msra.mxu0 0.0
        %783 = vmatprep.subr.mxu0 0.0
        %784 = vmatpush2.msra.mxu0 0.0
        %785 = vmatprep.subr.mxu0 0.0
        %786 = vmatpush2.msra.mxu0 0.0
        %787 = vmatprep.subr.mxu0 0.0
        %788 = vmatpush2.msra.mxu0 0.0
        %789 = vmatprep.subr.mxu0 0.0
        %790 = vmatpush2.msra.mxu0 0.0
        %791 = vmatprep.subr.mxu0 0.0
        %792 = vmatpush2.msra.mxu0 0.0
        %793 = vmatprep.subr.mxu0 0.0
        %794 = vmatpush2.msra.mxu0 0.0
        %795 = vmatprep.subr.mxu0 0.0
        %796 = vmatpush2.msra.mxu0 0.0
        %797 = vmatprep.mubr.f32.mxu0 0.0
        %798 = vmatmul.mubr.f32.gmra.mxu0 %v725
        %v799 = vpop.f32.mrf.mxu0
        %v800 = vadd.f32 0.0, %v799
        %v801 = vpop.f32.mrf.mxu0
        %v802 = vadd.f32 0.0, %v801
        %803 = vdwg.mxu0
        %v804 = vsel %vm352, %v800, 0.0
        %v805 = vsel %vm352, %v802, 0.0
        %v806 = vadd.f32 %v804, %v805
        %807 = vadd.xlane.f32.xlu0 %v806
        %v808 = vpop.xlane.xlu0 %807
        %v809 = vrcp.pop 256.0
        %v810 = vmul.f32 %v808, %v809
        %v811 = vsub.f32 %v720, %v810
        %v812 = vsub.f32 %v722, %v810
        %v813 = vmul.f32 %v811, %v811
        %v814 = vmul.f32 %v812, %v812
        %v816 = vsel %vm352, %v813, 0
        %v819 = vsel %vm352, %v814, 0
        %821 = vmatprep.subr.mxu0 0.0
        %822 = vmatpush1.msra.mxu0 0.0
        %823 = vmatprep.subr.mxu0 0.0
        %824 = vmatpush1.msra.mxu0 0.0
        %825 = vmatprep.subr.mxu0 0.0
        %826 = vmatpush1.msra.mxu0 0.0
        %827 = vmatprep.subr.mxu0 0.0
        %828 = vmatpush1.msra.mxu0 0.0
        %829 = vmatprep.subr.mxu0 0.0
        %830 = vmatpush1.msra.mxu0 0.0
        %831 = vmatprep.subr.mxu0 0.0
        %832 = vmatpush1.msra.mxu0 0.0
        %833 = vmatprep.subr.mxu0 0.0
        %834 = vmatpush1.msra.mxu0 0.0
        %835 = vmatprep.subr.mxu0 0.0
        %836 = vmatpush1.msra.mxu0 0.0
        %837 = vmatprep.subr.mxu0 0.0
        %838 = vmatpush1.msra.mxu0 0.0
        %839 = vmatprep.subr.mxu0 0.0
        %840 = vmatpush1.msra.mxu0 0.0
        %841 = vmatprep.subr.mxu0 0.0
        %842 = vmatpush1.msra.mxu0 0.0
        %843 = vmatprep.subr.mxu0 0.0
        %844 = vmatpush1.msra.mxu0 0.0
        %845 = vmatprep.subr.mxu0 0.0
        %846 = vmatpush1.msra.mxu0 0.0
        %847 = vmatprep.subr.mxu0 0.0
        %848 = vmatpush1.msra.mxu0 0.0
        %849 = vmatprep.subr.mxu0 0.0
        %850 = vmatpush1.msra.mxu0 0.0
        %851 = vmatprep.subr.mxu0 %v819
        %852 = vmatpush1.msra.mxu0 %v816
        %853 = vmatprep.subr.mxu0 0.0
        %854 = vmatpush2.msra.mxu0 0.0
        %855 = vmatprep.subr.mxu0 0.0
        %856 = vmatpush2.msra.mxu0 0.0
        %857 = vmatprep.subr.mxu0 0.0
        %858 = vmatpush2.msra.mxu0 0.0
        %859 = vmatprep.subr.mxu0 0.0
        %860 = vmatpush2.msra.mxu0 0.0
        %861 = vmatprep.subr.mxu0 0.0
        %862 = vmatpush2.msra.mxu0 0.0
        %863 = vmatprep.subr.mxu0 0.0
        %864 = vmatpush2.msra.mxu0 0.0
        %865 = vmatprep.subr.mxu0 0.0
        %866 = vmatpush2.msra.mxu0 0.0
        %867 = vmatprep.subr.mxu0 0.0
        %868 = vmatpush2.msra.mxu0 0.0
        %869 = vmatprep.subr.mxu0 0.0
        %870 = vmatpush2.msra.mxu0 0.0
        %871 = vmatprep.subr.mxu0 0.0
        %872 = vmatpush2.msra.mxu0 0.0
        %873 = vmatprep.subr.mxu0 0.0
        %874 = vmatpush2.msra.mxu0 0.0
        %875 = vmatprep.subr.mxu0 0.0
        %876 = vmatpush2.msra.mxu0 0.0
        %877 = vmatprep.subr.mxu0 0.0
        %878 = vmatpush2.msra.mxu0 0.0
        %879 = vmatprep.subr.mxu0 0.0
        %880 = vmatpush2.msra.mxu0 0.0
        %881 = vmatprep.subr.mxu0 0.0
        %882 = vmatpush2.msra.mxu0 0.0
        %883 = vmatprep.subr.mxu0 0.0
        %884 = vmatpush2.msra.mxu0 0.0
        %885 = vmatprep.mubr.f32.mxu0 0.0
        %886 = vmatmul.mubr.f32.gmra.mxu0 %v725
        %v887 = vpop.f32.mrf.mxu0
        %v888 = vadd.f32 0.0, %v887
        %v889 = vpop.f32.mrf.mxu0
        %v890 = vadd.f32 0.0, %v889
        %891 = vdwg.mxu0
        %v892 = vsel %vm352, %v888, 0.0
        %v893 = vsel %vm352, %v890, 0.0
        %v894 = vadd.f32 %v892, %v893
        %895 = vadd.xlane.f32.xlu0 %v894
        %v896 = vpop.xlane.xlu0 %895
        %v897 = vmul.f32 %v896, %v809
        %v898 = vadd.f32 %v897, 1e-05
        %v899 = vrsqrt.pop %v898
        %v900 = vmul.f32 %v811, %v899
        %v901 = vmul.f32 %v812, %v899
        %903 = vset.pattern.permute.xlu0 0
        %904 = vperm.xlu0 %903, %v339
        %v905 = vpop.permute.xlu0 %904
        %v907 = vmul.f32 %v900, %v905
        %v908 = vmul.f32 %v901, %v905
        %910 = vset.pattern.permute.xlu0 0
        %911 = vperm.xlu0 %910, %v340
        %v912 = vpop.permute.xlu0 %911
        %v914 = vadd.f32 %v907, %v912
        %v915 = vadd.f32 %v908, %v912
        %v917 = vadd.f32 %v914, %v331
        %v918 = vadd.f32 %v915, %v347
        %v919 = vmul.f32 %v917, 0.5
        %v920 = vmul.f32 %v918, 0.5
        %v921 = vmul.f32 %v917, 0.70710677
        %v922 = vmul.f32 %v918, 0.70710677
        %v923 = vand.u32 2147483647, %v921
        %v924 = vand.u32 2147483647, %v922
        %v925 = vmul.f32 %v923, 0.3275911
        %v926 = vmul.f32 %v924, 0.3275911
        %v927 = vadd.f32 %v925, 1.0
        %v928 = vadd.f32 %v926, 1.0
        %v929 = vrcp.pop %v927
        %v930 = vmul.f32 1.0, %v929
        %v931 = vrcp.pop %v928
        %v932 = vmul.f32 1.0, %v931
        %v933 = vmul.f32 %v930, 1.0614054
        %v934 = vmul.f32 %v932, 1.0614054
        %v935 = vadd.f32 %v933, -1.4531521
        %v936 = vadd.f32 %v934, -1.4531521
        %v937 = vmul.f32 %v935, %v930
        %v938 = vmul.f32 %v936, %v932
        %v939 = vadd.f32 %v937, 1.4214138
        %v940 = vadd.f32 %v938, 1.4214138
        %v941 = vmul.f32 %v939, %v930
        %v942 = vmul.f32 %v940, %v932
        %v943 = vadd.f32 %v941, -0.28449672
        %v944 = vadd.f32 %v942, -0.28449672
        %v945 = vmul.f32 %v943, %v930
        %v946 = vmul.f32 %v944, %v932
        %v947 = vadd.f32 %v945, 0.2548296
        %v948 = vadd.f32 %v946, 0.2548296
        %v949 = vmul.f32 %v947, %v930
        %v950 = vmul.f32 %v948, %v932
        %v951 = vmul.f32 %v923, %v923
        %v952 = vmul.f32 %v924, %v924
        %v953 = vsub.f32 0.0, %v951
        %v954 = vsub.f32 0.0, %v952
        %v955 = vmul.f32 %v953, 1.442695
        %v956 = vpow.pop %v955
        %v957 = vmul.f32 %v954, 1.442695
        %v958 = vpow.pop %v957
        %v959 = vmul.f32 %v949, %v956
        %v960 = vmul.f32 %v950, %v958
        %v961 = vsub.f32 1.0, %v959
        %v962 = vsub.f32 1.0, %v960
        %vm963 = vcmp.ge.f32.partialorder %v921, 0.0
        %vm964 = vcmp.ge.f32.partialorder %v922, 0.0
        %v965 = vsub.f32 0.0, %v961
        %v966 = vsub.f32 0.0, %v962
        %v967 = vsel %vm963, %v961, %v965
        %v968 = vsel %vm964, %v962, %v966
        %v969 = vadd.f32 %v967, 1.0
        %v970 = vadd.f32 %v968, 1.0
        %v971 = vmul.f32 %v919, %v969
        %v972 = vmul.f32 %v920, %v970
        %v975 = vcombine.low %v971, %v972
        %977 = vst [vmem:[%s325] sm:$0xff] %v975
        %s978 = sand.u32 %s225, 1
        %s979 = scalar_lea.sflag [#allocation3], %s978
        %s980 = sand.u32 %s225, 1
        %s981 = smul.addr %s980, 8
        %s982 = scalar_lea.vmem [#allocation2], %s981
        // Predicated region
        $region57: #{tpu_custom_call.1} parent=55 // pred_check
          %p983 = pneg %p235
        $region58: #{tpu_custom_call.1} parent=55 // pred_check_branch
          %985 = sbr.rel (%p983) target = $region60
        $region59: #{tpu_custom_call.1} parent=55 // pred_region
          %s987 = ssub.s32 128, 128
          %988 = vsyncadd %s979, %s987
          %s989 = smul.addr %s23, 2
          %s990 = smul.addr %s989, 64
          %s991 = scalar_lea.hbm %s9, %s990
          %s993 = sshll.u32 %s982, 4
          %s994 = int_to_ptr.vmem [resolvable:$true] %s993
          %996 = dma.vmem_to_hbm [thread:$0]  %s994, 128, %s991, %s979
        $region60: #{tpu_custom_call.1} parent=55 // pred_fallthru
          _
      $region56: #{tpu_custom_call.1} parent=5 // pred_fallthru
        _
      %p997 = scmp.le.s32.totalorder 2, %s18
      // Predicated region
      $region61: #{tpu_custom_call.1} parent=5 // pred_check
        %p998 = pneg %p997
      $region62: #{tpu_custom_call.1} parent=5 // pred_check_branch
        %1000 = sbr.rel (%p998) target = $region64
      $region63: #{tpu_custom_call.1} parent=5 // pred_region
        %s1001 = ssub.s32 %s18, 2
        // Predicated region
        $region65: #{tpu_custom_call.1} parent=63 // pred_check
          %p1002 = pneg %p241
        $region66: #{tpu_custom_call.1} parent=63 // pred_check_branch
          %1004 = sbr.rel (%p1002) target = $region68
        $region67: #{tpu_custom_call.1} parent=63 // pred_region
          %s1005 = sand.u32 %s226, 1
          %s1006 = scalar_lea.sflag [#allocation3], %s1005
          %s1007 = sand.u32 %s226, 1
          %s1008 = smul.addr %s1007, 8
          %s1009 = scalar_lea.vmem [#allocation2], %s1008
          %1010 = dma.done %s1006, 128
        $region68: #{tpu_custom_call.1} parent=63 // pred_fallthru
          _
      $region64: #{tpu_custom_call.1} parent=5 // pred_fallthru
        _
    $region6: #{tpu_custom_call.1} parent=1 // loop_footer
      %s22 = sadd.s32 1, %s18
    $region7: #{tpu_custom_call.1} parent=1 // loop_footer_branch
      %17 = sbr.rel target = $region3
    $region8: #{tpu_custom_call.1} parent=1 // loop_exit
      _
    %1011 = vsyncpa [#allocation3], 1
    %s1012 = scalar_lea.sflag [#allocation3], 1
    %1013 = vsyncpa %s1012, 1

</llo_original>
